<compile_context>
chip_gen: v6e
topology: v6e:2x2x1
jax: 0.10.0
libtpu: 0.0.40
codegen_flags: <defaults>
</compile_context>

<pallas_src>
import functools

import jax
import jax.numpy as jnp
from jax.experimental import pallas as pl
from jax.experimental.pallas import tpu as pltpu

_LANES = 128
_SUBLANES = 8
_MAX_BLOCK_ROWS = 2048  # (2048,128) f32 = 1 MiB per input stream


def _num_tensorcores() -> int:
    """Best-effort TensorCore count per addressable device (perf-only hint)."""
    try:
        kind = getattr(jax.devices()[0], "device_kind", "").lower()
    except Exception:
        return 1
    if "v7" in kind:
        return 2  # v7x: 2 TCs per chip
    if "v4" in kind or "v5p" in kind:
        return 2  # megacore chips
    return 1      # v5e / v6e


def _make_binary_kernel(n_r: int, steps: int, block_rows: int):
    """BCE with implicit binary targets: t=0 for flat index < n_r, else t=1.

    Matches the trainer's convention (label_r all zeros, label_a all ones);
    only x and w are DMA'd.  One log per element (PyTorch clamps log at -100).
    """

    def kernel(x_ref, w_ref, o_ref):
        p = pl.program_id(0)
        r = pl.program_id(1)

        @pl.when(r == 0)
        def _():
            o_ref[...] = jnp.zeros_like(o_ref)

        x = x_ref[...]
        w = w_ref[...]

        base_row = (p * steps + r) * block_rows
        row_ids = jax.lax.broadcasted_iota(jnp.int32, (block_rows, _LANES), 0)
        lane_ids = jax.lax.broadcasted_iota(jnp.int32, (block_rows, _LANES), 1)
        gidx = (base_row + row_ids) * _LANES + lane_ids
        is_anom = gidx >= n_r  # target == 1 region (label_a)

        prob = jnp.where(is_anom, x, 1.0 - x)
        per_elem = -w * jnp.maximum(jnp.log(prob), -100.0)

        # Pure VPU adds into the resident (1,8,128) output block; cross-lane /
        # cross-sublane / cross-chunk finish happens once in the wrapper.
        o_ref[...] += per_elem.reshape(-1, _SUBLANES, _LANES).sum(axis=0)[None]

    return kernel


def _soft_kernel(x_ref, t_ref, w_ref, o_ref):
    """Exact BCE for arbitrary (soft) targets — two logs per element."""
    r = pl.program_id(1)

    @pl.when(r == 0)
    def _():
        o_ref[...] = jnp.zeros_like(o_ref)

    x = x_ref[...]
    t = t_ref[...]
    w = w_ref[...]
    log_x = jnp.maximum(jnp.log(x), -100.0)
    log_1mx = jnp.maximum(jnp.log(1.0 - x), -100.0)
    per_elem = -w * (t * (log_x - log_1mx) + log_1mx)
    o_ref[...] += per_elem.reshape(-1, _SUBLANES, _LANES).sum(axis=0)[None]


@functools.partial(
    jax.jit,
    static_argnames=("binary_targets", "max_block_rows", "min_pallas_elems"))
def macro_loss(inp, label_r, label_a, weights, *, binary_targets=True,
               max_block_rows=_MAX_BLOCK_ROWS, min_pallas_elems=0):
    """MacroLoss.forward: mean_i( -w_i*(t_i*log x_i + (1-t_i)*log(1-x_i)) ),
    t = cat(label_r, label_a).

    binary_targets=True (default) assumes label_r are all 0 and label_a are all
    1 (the S3R trainer's usage) and reconstructs t in-kernel; pass
    binary_targets=False for arbitrary/soft targets (exact nn.BCELoss math).
    """
    x = jnp.reshape(inp, (-1,)).astype(jnp.float32)
    w = jnp.reshape(weights, (-1,)).astype(jnp.float32)
    n_r = int(label_r.size)
    n = n_r + int(label_a.size)
    if x.shape[0] != n or w.shape[0] != n:
        raise ValueError(
            "input.squeeze(), cat(label_r, label_a) and weights must share length N")

    # Tiny-N fallback: below this threshold the kernel has no bandwidth
    # advantage and launch latency dominates -> fused jnp.
    if n < min_pallas_elems:
        t = jnp.concatenate(
            [jnp.reshape(label_r, (-1,)),
             jnp.reshape(label_a, (-1,))]).astype(jnp.float32)
        log_x = jnp.maximum(jnp.log(x), -100.0)
        log_1mx = jnp.maximum(jnp.log(1.0 - x), -100.0)
        return jnp.mean(-w * (t * log_x + (1.0 - t) * log_1mx))

    # ---------------- tiling (handles any N) ----------------
    max_block_rows = max(_SUBLANES, (int(max_block_rows) // _SUBLANES) * _SUBLANES)
    rows_needed = pl.cdiv(n, _LANES)
    # Two independent partial sums only where two TensorCores can own them.
    n_parallel = 2 if (_num_tensorcores() >= 2 and rows_needed >= 16) else 1
    rows_per_chunk = pl.cdiv(pl.cdiv(rows_needed, n_parallel), _SUBLANES) * _SUBLANES
    block_rows = min(max_block_rows, rows_per_chunk)
    steps = pl.cdiv(rows_per_chunk, block_rows)
    rows_total = n_parallel * steps * block_rows
    n_pad = rows_total * _LANES

    # Single fused pad+reshape per input stream (no zero-buffer + scatter, no
    # weight pre-scaling).  Padded tail contributes exactly 0.
    def _tile(v):
        return jnp.pad(v, (0, n_pad - n)).reshape(rows_total, _LANES)

    in_spec = pl.BlockSpec((block_rows, _LANES), lambda p, r: (p * steps + r, 0))
    out_spec = pl.BlockSpec((1, _SUBLANES, _LANES), lambda p, r: (p, 0, 0))
    out_shape = jax.ShapeDtypeStruct((n_parallel, _SUBLANES, _LANES), jnp.float32)
    compiler_params = pltpu.CompilerParams(
        dimension_semantics=("parallel", "arbitrary"))

    if binary_targets:
        partials = pl.pallas_call(
            _make_binary_kernel(n_r, steps, block_rows),
            out_shape=out_shape,
            grid=(n_parallel, steps),
            in_specs=[in_spec, in_spec],
            out_specs=out_spec,
            compiler_params=compiler_params,
            cost_estimate=pl.CostEstimate(
                flops=8 * n_pad, transcendentals=n_pad,
                bytes_accessed=2 * 4 * n_pad + 4 * n_parallel * _SUBLANES * _LANES),
        )(_tile(x), _tile(w))
    else:
        t = jnp.concatenate(
            [jnp.reshape(label_r, (-1,)),
             jnp.reshape(label_a, (-1,))]).astype(jnp.float32)
        partials = pl.pallas_call(
            _soft_kernel,
            out_shape=out_shape,
            grid=(n_parallel, steps),
            in_specs=[in_spec, in_spec, in_spec],
            out_specs=out_spec,
            compiler_params=compiler_params,
            cost_estimate=pl.CostEstimate(
                flops=9 * n_pad, transcendentals=2 * n_pad,
                bytes_accessed=3 * 4 * n_pad + 4 * n_parallel * _SUBLANES * _LANES),
        )(_tile(x), _tile(t), _tile(w))

    # 1/N mean factor applied once on the scalar finish.
    return jnp.sum(partials) * (1.0 / n)


def _reference(inp, target, weights):
    x = jnp.reshape(inp, (-1,)).astype(jnp.float32)
    t = jnp.reshape(target, (-1,)).astype(jnp.float32)
    w = jnp.reshape(weights, (-1,)).astype(jnp.float32)
    log_x = jnp.maximum(jnp.log(x), -100.0)
    log_1mx = jnp.maximum(jnp.log(1.0 - x), -100.0)
    return jnp.mean(-w * (t * log_x + (1.0 - t) * log_1mx))


if __name__ == "__main__":
    key = jax.random.PRNGKey(0)

    # Trainer-scale shapes: per-class batch of 8 clips, one sigmoid score each
    # with a trailing singleton dim (squeezed by the module).
    batch = 8
    n = 2 * batch
    k_in, k_w = jax.random.split(key)
    inp = jax.nn.sigmoid(jax.random.normal(k_in, (n, 1), jnp.float32))
    label_r = jnp.zeros((batch,), jnp.float32)   # regular videos  -> label 0
    label_a = jnp.ones((batch,), jnp.float32)    # anomalous videos -> label 1
    weights = 0.5 + jax.random.uniform(k_w, (n,), jnp.float32)
    ref = _reference(inp, jnp.concatenate([label_r, label_a]), weights)

    # Binary fast path (no target DMA, single log).
    loss = macro_loss(inp, label_r, label_a, weights)
    jax.block_until_ready(loss)
    assert jnp.allclose(loss, ref, rtol=1e-4, atol=1e-5), (loss, ref)

    # Exact two-log path; also exercises (N,1)-shaped weights robustness.
    loss_soft = macro_loss(inp, label_r, label_a, weights.reshape(n, 1),
                           binary_targets=False)
    jax.block_until_ready(loss_soft)
    assert jnp.allclose(loss_soft, ref, rtol=1e-4, atol=1e-5), (loss_soft, ref)

    # Tiny-N jnp fallback path.
    loss_fb = macro_loss(inp, label_r, label_a, weights, min_pallas_elems=1 << 20)
    jax.block_until_ready(loss_fb)
    assert jnp.allclose(loss_fb, ref, rtol=1e-4, atol=1e-5), (loss_fb, ref)

    # Larger N: multi-step reduction (max_block_rows=8 forces steps > 1), the
    # optional 2-way parallel split, and a non-trivially padded tail in BOTH
    # kernel paths (n=6000 pads up to a multiple of 1024 elements).
    batch2 = 3000
    n2 = 2 * batch2
    k_in2, k_w2 = jax.random.split(jax.random.PRNGKey(1))
    inp2 = jax.nn.sigmoid(jax.random.normal(k_in2, (n2, 1), jnp.float32))
    label_r2 = jnp.zeros((batch2,), jnp.float32)
    label_a2 = jnp.ones((batch2,), jnp.float32)
    weights2 = 0.5 + jax.random.uniform(k_w2, (n2,), jnp.float32)
    ref2 = _reference(inp2, jnp.concatenate([label_r2, label_a2]), weights2)

    loss2 = macro_loss(inp2, label_r2, label_a2, weights2, max_block_rows=8)
    jax.block_until_ready(loss2)
    assert jnp.allclose(loss2, ref2, rtol=1e-4, atol=1e-5), (loss2, ref2)

    loss2_soft = macro_loss(inp2, label_r2, label_a2, weights2,
                            binary_targets=False, max_block_rows=8)
    jax.block_until_ready(loss2_soft)
    assert jnp.allclose(loss2_soft, ref2, rtol=1e-4, atol=1e-5), (loss2_soft, ref2)

    # Genuinely soft (non-{0,1}) targets through the exact path.
    k_t = jax.random.PRNGKey(2)
    soft_r = jax.random.uniform(k_t, (batch,), jnp.float32)
    soft_a = jax.random.uniform(jax.random.fold_in(k_t, 1), (batch,), jnp.float32)
    ref_soft = _reference(inp, jnp.concatenate([soft_r, soft_a]), weights)
    loss3 = macro_loss(inp, soft_r, soft_a, weights, binary_targets=False)
    jax.block_until_ready(loss3)
    assert jnp.allclose(loss3, ref_soft, rtol=1e-4, atol=1e-5), (loss3, ref_soft)

    print("KERNEL_OK")
</pallas_src>

<mosaic_0001>
module attributes {stable_mosaic.version = 11 : i64} {
  func.func @kernel(%arg0: i32, %arg1: i32, %arg2: memref<8x128xf32, #tpu.memory_space<vmem>>, %arg3: memref<8x128xf32, #tpu.memory_space<vmem>>, %arg4: memref<1x8x128xf32, #tpu.memory_space<vmem>>) attributes {dimension_semantics = [#tpu.dimension_semantics<parallel>, #tpu.dimension_semantics<arbitrary>], iteration_bounds = array<i64: 1, 1>, scalar_prefetch = 0 : i64, scratch_operands = 0 : i64, tpu.core_type = #tpu.core_type<tc>, window_params = [{transform_indices = @transform_0, window_bounds = array<i64: 8, 128>}, {transform_indices = @transform_1, window_bounds = array<i64: 8, 128>}, {transform_indices = @transform_2, window_bounds = array<i64: 1, 8, 128>}]} {
    %c0_i32 = arith.constant 0 : i32
    %0 = arith.cmpi eq, %arg1, %c0_i32 : i32
    %1 = arith.extui %0 : i1 to i32
    %c0_i32_0 = arith.constant 0 : i32
    %2 = arith.cmpi ne, %1, %c0_i32_0 : i32
    scf.if %2 {
      %cst_14 = arith.constant 0.000000e+00 : f32
      %32 = vector.broadcast %cst_14 : f32 to vector<1x8x128xf32>
      %c0_15 = arith.constant 0 : index
      %c0_16 = arith.constant 0 : index
      %c0_17 = arith.constant 0 : index
      %33 = vector.load %arg4[%c0_15, %c0_16, %c0_17] : memref<1x8x128xf32, #tpu.memory_space<vmem>>, vector<1x8x128xf32>
      tpu.vector_store %arg4[%c0_15, %c0_16, %c0_17], %32 {strides = array<i32>} : memref<1x8x128xf32, #tpu.memory_space<vmem>>, vector<1x8x128xf32>,
    } else {
    }
    %c0 = arith.constant 0 : index
    %c0_1 = arith.constant 0 : index
    %3 = vector.load %arg2[%c0, %c0_1] : memref<8x128xf32, #tpu.memory_space<vmem>>, vector<8x128xf32>
    %c0_2 = arith.constant 0 : index
    %c0_3 = arith.constant 0 : index
    %4 = vector.load %arg3[%c0_2, %c0_3] : memref<8x128xf32, #tpu.memory_space<vmem>>, vector<8x128xf32>
    %c1_i32 = arith.constant 1 : i32
    %5 = arith.muli %arg0, %c1_i32 : i32
    %6 = arith.addi %5, %arg1 : i32
    %c8_i32 = arith.constant 8 : i32
    %7 = arith.muli %6, %c8_i32 : i32
    %8 = tpu.iota {dimensions = array<i32: 0>} : vector<8x128xi32>
    %9 = tpu.iota {dimensions = array<i32: 1>} : vector<8x128xi32>
    %10 = vector.broadcast %7 : i32 to vector<8x128xi32>
    %11 = arith.addi %10, %8 : vector<8x128xi32>
    %c128_i32 = arith.constant 128 : i32
    %12 = vector.broadcast %c128_i32 : i32 to vector<8x128xi32>
    %13 = arith.muli %11, %12 : vector<8x128xi32>
    %14 = arith.addi %13, %9 : vector<8x128xi32>
    %c8_i32_4 = arith.constant 8 : i32
    %15 = vector.broadcast %c8_i32_4 : i32 to vector<8x128xi32>
    %16 = arith.cmpi sge, %14, %15 : vector<8x128xi32>
    %cst = arith.constant 1.000000e+00 : f32
    %17 = vector.broadcast %cst : f32 to vector<8x128xf32>
    %18 = arith.subf %17, %3 : vector<8x128xf32>
    %19 = arith.select %16, %3, %18 : vector<8x128xi1>, vector<8x128xf32>
    %cst_5 = arith.constant 0.000000e+00 : f32
    %20 = vector.broadcast %cst_5 : f32 to vector<8x128xf32>
    %21 = arith.subf %20, %4 : vector<8x128xf32>
    %22 = math.log %19 : vector<8x128xf32>
    %cst_6 = arith.constant -1.000000e+02 : f32
    %23 = vector.broadcast %cst_6 : f32 to vector<8x128xf32>
    %24 = arith.maximumf %22, %23 : vector<8x128xf32>
    %25 = arith.mulf %21, %24 : vector<8x128xf32>
    %c0_7 = arith.constant 0 : index
    %c0_8 = arith.constant 0 : index
    %c0_9 = arith.constant 0 : index
    %26 = vector.load %arg4[%c0_7, %c0_8, %c0_9] : memref<1x8x128xf32, #tpu.memory_space<vmem>>, vector<1x8x128xf32>
    %27 = vector.shape_cast %25 : vector<8x128xf32> to vector<1x8x128xf32>
    %cst_10 = arith.constant dense<0.000000e+00> : vector<8x128xf32>
    %28 = vector.multi_reduction <add>, %27, %cst_10 [0] : vector<1x8x128xf32> to vector<8x128xf32>
    %29 = vector.shape_cast %28 : vector<8x128xf32> to vector<1x8x128xf32>
    %30 = arith.addf %26, %29 : vector<1x8x128xf32>
    %c0_11 = arith.constant 0 : index
    %c0_12 = arith.constant 0 : index
    %c0_13 = arith.constant 0 : index
    %31 = vector.load %arg4[%c0_11, %c0_12, %c0_13] : memref<1x8x128xf32, #tpu.memory_space<vmem>>, vector<1x8x128xf32>
    tpu.vector_store %arg4[%c0_11, %c0_12, %c0_13], %30 {strides = array<i32>} : memref<1x8x128xf32, #tpu.memory_space<vmem>>, vector<1x8x128xf32>,
    return
  }
  func.func @transform_0(%arg0: i32, %arg1: i32) -> (i32, i32) {
    %c1_i32 = arith.constant 1 : i32
    %0 = arith.muli %arg0, %c1_i32 : i32
    %1 = arith.addi %0, %arg1 : i32
    %c0_i32 = arith.constant 0 : i32
    %c0_i32_0 = arith.constant 0 : i32
    return %1, %c0_i32 : i32, i32
  }
  func.func @transform_1(%arg0: i32, %arg1: i32) -> (i32, i32) {
    %c1_i32 = arith.constant 1 : i32
    %0 = arith.muli %arg0, %c1_i32 : i32
    %1 = arith.addi %0, %arg1 : i32
    %c0_i32 = arith.constant 0 : i32
    %c0_i32_0 = arith.constant 0 : i32
    return %1, %c0_i32 : i32, i32
  }
  func.func @transform_2(%arg0: i32, %arg1: i32) -> (i32, i32, i32) {
    %c0_i32 = arith.constant 0 : i32
    %c0_i32_0 = arith.constant 0 : i32
    %c0_i32_1 = arith.constant 0 : i32
    return %arg0, %c0_i32, %c0_i32_0 : i32, i32, i32
  }
}

</mosaic_0001>

<llo_original>
// kernel: macro_loss.1
$region0: #{macro_loss.1}
  #allocation0 [shape = 'u32[]', space=smem, size = 0x4, offset = 0x4, fixed_abs, tag = 'smem constant byte address 0x4 - core index']
  #allocation1 [shape = 'u32[144,128]{1,0:T(1,128)}', space=vmem, size = 0x12000, scoped, tag = 'internal scratch']
  %s0 = inlined_call_operand.vmem [shape: f32[8,128], index: 0, kind: input, shape index: {}]
  %s1 = inlined_call_operand.vmem [shape: f32[8,128], index: 1, kind: input, shape index: {}]
  %s2 = inlined_call_operand.vmem [shape: f32[1,8,128], index: 2, kind: output, shape index: {}]
  %s3 = sld [smem:[#allocation0]]
  $region22: #{macro_loss.1} parent=0
    _
  %s5 = ssub.s32 1, %s3
  %s6 = scalar_select 0, %s5, %s3
  // Predicated region
  $region2: #{macro_loss.1} parent=0 // pred_check
    _
  $region3: #{macro_loss.1} parent=0 // pred_check_branch
    %8 = sbr.rel (0) target = $region5
  $region4: #{macro_loss.1} parent=0 // pred_region
    %s9 = sadd.s32 0, 0
    %p10 = scmp.lt.s32.totalorder %s9, 0
    %s11 = scalar_select %p10, %s9, 0
    %s12 = smul.addr %s11, 8
    %s13 = scalar_lea.vmem %s0, %s12
    %s14 = sadd.s32 0, 0
  $region5: #{macro_loss.1} parent=0 // pred_fallthru
    _
  // Predicated region
  $region6: #{macro_loss.1} parent=0 // pred_check
    _
  $region7: #{macro_loss.1} parent=0 // pred_check_branch
    %16 = sbr.rel (0) target = $region9
  $region8: #{macro_loss.1} parent=0 // pred_region
    %s17 = sadd.s32 0, 0
    %p18 = scmp.lt.s32.totalorder %s17, 0
    %s19 = scalar_select %p18, %s17, 0
    %s20 = smul.addr %s19, 8
    %s21 = scalar_lea.vmem %s1, %s20
    %s22 = sadd.s32 0, 0
  $region9: #{macro_loss.1} parent=0 // pred_fallthru
    _
  %s23 = sadd.s32 0, 0
  %p24 = scmp.lt.s32.totalorder %s23, 0
  %s25 = scalar_select %p24, %s23, 0
  %s26 = smul.addr %s25, 8
  %s27 = scalar_lea.vmem %s0, %s26
  %s28 = sadd.s32 0, 0
  %p29 = scmp.lt.s32.totalorder %s28, 0
  %s30 = scalar_select %p29, %s28, 0
  %s31 = smul.addr %s30, 8
  %s32 = scalar_lea.vmem %s1, %s31
  %s33 = sadd.s32 0, 0
  %p34 = scmp.lt.s32.totalorder %s33, 0
  %s35 = scalar_select %p34, %s33, 0
  %s36 = smul.addr %s35, 8
  %s37 = scalar_lea.vmem %s0, %s36
  %s38 = sadd.s32 0, 0
  %s39 = sadd.s32 0, 0
  %p40 = scmp.lt.s32.totalorder %s39, 0
  %s41 = scalar_select %p40, %s39, 0
  %s42 = smul.addr %s41, 8
  %s43 = scalar_lea.vmem %s1, %s42
  %s44 = sadd.s32 0, 0
  %p45 = scmp.eq.s32.totalorder 0, 0
  // Predicated region
  $region10: #{macro_loss.1} parent=0 // pred_check
    %p46 = pneg %p45
  $region11: #{macro_loss.1} parent=0 // pred_check_branch
    %48 = sbr.rel (%p46) target = $region13
  $region12: #{macro_loss.1} parent=0 // pred_region
    %49 = vst [vmem:[%s2] sm:$0xff] 0.0
  $region13: #{macro_loss.1} parent=0 // pred_fallthru
    _
  %v50 = vld [vmem:[%s37] sm:$0xff]
  %v51 = vld [vmem:[%s43] sm:$0xff]
  %s52 = sadd.s32 0, 0
  %s53 = smul.u32 %s52, 8
  %v54 = vlaneseq
  %v55 = vshrl.u32 %v54, 7
  %v56 = vlaneseq
  %v57 = vand.u32 %v56, 127
  %v58 = vstv %s53
  %v59 = vadd.s32 %v58, %v55
  %v60 = vmul.u32 %v59, 128
  %v61 = vadd.s32 %v60, %v57
  %vm62 = vcmp.ge.s32.totalorder %v61, 8
  %v63 = vsub.f32 1.0, %v50
  %v64 = vsel %vm62, %v50, %v63
  %v65 = vsub.f32 0.0, %v51
  %v66 = vlog2.pop %v64
  %v67 = vmul.f32 %v66, 0.6931472
  %v68 = vmax.f32 %v67, -100.0
  %v69 = vmul.f32 %v65, %v68
  %v70 = vld [vmem:[%s2] sm:$0xff]
  %v71 = vadd.f32 %v69, 0.0
  %v72 = vadd.f32 %v70, %v71
  %73 = vst [vmem:[%s2] sm:$0xff] %v72
  // Predicated region
  $region14: #{macro_loss.1} parent=0 // pred_check
    _
  $region15: #{macro_loss.1} parent=0 // pred_check_branch
    %75 = sbr.rel (0) target = $region17
  $region16: #{macro_loss.1} parent=0 // pred_region
    _
  $region17: #{macro_loss.1} parent=0 // pred_fallthru
    _
  // Predicated region
  $region18: #{macro_loss.1} parent=0 // pred_check
    _
  $region19: #{macro_loss.1} parent=0 // pred_check_branch
    %77 = sbr.rel (0) target = $region21
  $region20: #{macro_loss.1} parent=0 // pred_region
    _
  $region21: #{macro_loss.1} parent=0 // pred_fallthru
    _

</llo_original>
